<compile_context>
chip_gen: v5e
topology: v5e:2x2
jax: 0.10.0
libtpu: 0.0.40
codegen_flags: <defaults>
</compile_context>

<pallas_src>
import math

import jax
import jax.numpy as jnp
from jax.experimental import pallas as pl
from jax.experimental.pallas import tpu as pltpu

NEG_SLOPE = 0.2
BN_EPS = 1e-5


# ----------------------------------------------------------------------------
# In-kernel helpers
# ----------------------------------------------------------------------------
def _leaky(v):
    return jnp.where(v > 0, v, NEG_SLOPE * v)


def _sym_norm_adj_t(a):
    """gen_adj(a)^T = D @ a @ D with D = diag(rowsum(a)^-0.5); no transpose of `a`."""
    n = a.shape[0]
    d = jax.lax.rsqrt(jnp.sum(a, axis=1, keepdims=True))        # (n, 1)
    d_rows = jnp.broadcast_to(d, (n, n))                        # d_rows[i, j] = d_i
    return a * d_rows * d_rows.T                                # d_i * a[i, j] * d_j


def _block_diag(blocks):
    """Block-diagonal assembly of equally-shaped 2-D blocks (trace-time concats)."""
    if len(blocks) == 1:
        return blocks[0]
    z = jnp.zeros_like(blocks[0])
    rows = [jnp.concatenate([blk if j == i else z for j in range(len(blocks))], axis=1)
            for i, blk in enumerate(blocks)]
    return jnp.concatenate(rows, axis=0)


# ----------------------------------------------------------------------------
# Fused D-GCN forward kernel (single grid-less invocation, everything in VMEM)
# ----------------------------------------------------------------------------
def _dgc_fused_kernel(x_ref, out1_ref, w_ref, cgb_ref, nco_ref, o_x_ref, o_loss_ref):
    f32 = jnp.float32
    B, C, N = x_ref.shape
    BN = B * N

    # ---- unpack parameter slabs (static in-VMEM slices, no extra DMAs) -------
    w_all = w_ref[...]                          # (3C, C)
    sw_t = w_all[0:C, :]                        # static_weight^T
    dw_t = w_all[C:2 * C, :]                    # dynamic_weight^T
    cg_w = w_all[2 * C:3 * C, :]                # BN-folded conv_global weight
    cg_b = cgb_ref[...]                         # (C, 1)  BN-folded conv_global bias
    nco = nco_ref[...]                          # (N, 2C + N + 1)
    w_co = nco[:, 0:2 * C]                      # (N, 2C) conv_create_co_mat weight
    adj_raw = nco[:, 2 * C:2 * C + N]           # (N, N)  adj_param
    co_b = nco[:, 2 * C + N:2 * C + N + 1]      # (N, 1)  conv_create_co_mat bias

    # ---- static adjacency: min/max normalize, then D^-0.5 symmetric norm -----
    a_min = jnp.min(adj_raw, keepdims=True)
    a_max = jnp.max(adj_raw, keepdims=True)
    adj_t_s = _sym_norm_adj_t((adj_raw - a_min) / (a_max - a_min))           # (N, N)

    # ---- lane-stacked activations: columns [b*N:(b+1)*N] hold batch b --------
    x_ln = jnp.concatenate([x_ref[b] for b in range(B)], axis=1)             # (C, BN)

    # ---- static GCN + residual: one MXU push per matmul for the whole batch --
    #   (LeakyReLU(adj @ x^T) @ W)^T == W^T @ LeakyReLU(x @ adj^T); adj^T = D a D
    adj_s_blk = _block_diag([adj_t_s] * B)                                   # (BN, BN)
    h_ln = _leaky(jnp.dot(x_ln, adj_s_blk, preferred_element_type=f32))      # (C, BN)
    xr_ln = x_ln + jnp.dot(sw_t, h_ln, preferred_element_type=f32)           # residual

    # ---- global branch: per-batch GAP via block-diag 1/N matmul, then --------
    # ---- conv_global with BN(eval) folded into weight/bias, then LeakyReLU ---
    seg_mean = _block_diag([jnp.full((N, N), 1.0 / N, f32)] * B)             # (BN, BN)
    x_glb_ln = jnp.dot(xr_ln, seg_mean, preferred_element_type=f32)          # (C, BN)
    g_ln = _leaky(jnp.dot(cg_w, x_glb_ln, preferred_element_type=f32) + cg_b)

    # ---- conv_create_co_mat(concat([x_glb, x])) == w_co @ vstack([g, x]) -----
    gx_ln = jnp.concatenate([g_ln, xr_ln], axis=0)                           # (2C, BN)
    dyn_ln = jnp.dot(w_co, gx_ln, preferred_element_type=f32) + co_b         # (N, BN)

    # ---- batch-global min/max normalization of the raw dynamic adjacency -----
    d_min = jnp.min(dyn_ln, keepdims=True)
    d_max = jnp.max(dyn_ln, keepdims=True)
    dyn_ln = (dyn_ln - d_min) / (d_max - d_min)

    # block-diagonal form: reused by the loss contraction and the dynamic GCN
    dyn_blk = _block_diag([dyn_ln[:, b * N:(b + 1) * N] for b in range(B)])  # (BN, BN)

    # ---- adjacency loss: t = out1 @ dyn / N ; loss = sum_b ||out1_b - t_b||_2 -
    out1_all = out1_ref[...]                                                 # (B, N)
    out1_blk = _block_diag([out1_all[b:b + 1, :] for b in range(B)])         # (B, BN)
    t_blk = jnp.dot(out1_blk, dyn_blk, preferred_element_type=f32) * (1.0 / N)
    diff = out1_blk - t_blk                                                  # (B, BN)
    per_b = jnp.sqrt(jnp.sum(diff * diff, axis=1, keepdims=True))            # (B, 1)
    o_loss_ref[...] = jnp.sum(per_b, axis=0, keepdims=True)                  # (1, 1)

    # ---- dynamic GCN: LeakyReLU(W_d^T @ LeakyReLU(x @ gen_adj(dyn)^T)) -------
    adj_d_blk = _sym_norm_adj_t(dyn_blk)          # per-block D a D, zeros elsewhere
    hd_ln = _leaky(jnp.dot(xr_ln, adj_d_blk, preferred_element_type=f32))    # (C, BN)
    out_ln = _leaky(jnp.dot(dw_t, hd_ln, preferred_element_type=f32))        # (C, BN)
    for b in range(B):
        o_x_ref[b] = out_ln[:, b * N:(b + 1) * N]


# ----------------------------------------------------------------------------
# One-time parameter packing (call OUTSIDE jit, at parameter-load time)
# ----------------------------------------------------------------------------
def pack_params(params):
    """Folds the eval-mode BatchNorm into conv_global and packs every static parameter
    into three DMA slabs so the jitted forward contains only the pallas_call."""
    bn_scale = params['bn_global_g'] * jax.lax.rsqrt(params['bn_global_rv'] + BN_EPS)
    bn_shift = params['bn_global_b'] - params['bn_global_rm'] * bn_scale
    cg_w = params['conv_global_w'][:, :, 0] * bn_scale[:, None]              # BN folded
    cg_bias = (bn_scale * params['conv_global_b'] + bn_shift)[:, None]       # (C, 1)
    w_pack = jnp.concatenate([params['static_weight'].T,
                              params['dynamic_weight'].T,
                              cg_w], axis=0).astype(jnp.float32)             # (3C, C)
    nco_pack = jnp.concatenate([params['conv_co_w'][:, :, 0],
                                params['adj_param'],
                                params['conv_co_b'][:, None]],
                               axis=1).astype(jnp.float32)                   # (N, 2C+N+1)
    return {'w_pack': w_pack,
            'cg_bias': cg_bias.astype(jnp.float32),
            'nco_pack': nco_pack}


# ----------------------------------------------------------------------------
# Wrapper: the jitted path is the pallas_call only
# ----------------------------------------------------------------------------
def dgc_forward_pallas(packed, x, out1):
    B, C, N = x.shape
    BN = B * N
    f32 = jnp.float32

    # advisory cost hint so XLA can schedule surrounding ops around this tiny custom call
    flops = 2 * (3 * C * BN * BN + 3 * C * C * BN + N * 2 * C * BN + B * BN * BN)
    bytes_accessed = 4 * (2 * B * C * N + B * N + 3 * C * C + C + N * (2 * C + N + 1) + 1)
    cost = pl.CostEstimate(flops=flops, transcendentals=2 * B * N + N + B,
                           bytes_accessed=bytes_accessed)

    vmem = pl.BlockSpec(memory_space=pltpu.MemorySpace.VMEM)   # whole array resident
    out_x, loss = pl.pallas_call(
        _dgc_fused_kernel,
        out_shape=(jax.ShapeDtypeStruct((B, C, N), f32),
                   jax.ShapeDtypeStruct((1, 1), f32)),
        in_specs=[vmem] * 5,
        out_specs=(vmem, vmem),
        cost_estimate=cost,
    )(x, out1, packed['w_pack'], packed['cg_bias'], packed['nco_pack'])
    return out_x, loss[0, 0]


# ----------------------------------------------------------------------------
# Pure-JAX reference (mirrors the PyTorch module op-for-op)
# ----------------------------------------------------------------------------
def dgc_forward_ref(params, x, out1):
    B, C, N = x.shape

    def gcn(inp, weight, adj):
        h = jnp.matmul(adj, jnp.swapaxes(inp, 1, 2))
        h = jnp.where(h > 0, h, NEG_SLOPE * h)
        return jnp.swapaxes(jnp.matmul(h, weight), 1, 2)

    # static GCN + residual
    a = params['adj_param']
    a = (a - jnp.min(a)) / (jnp.max(a) - jnp.min(a))
    d = jnp.power(jnp.sum(a, axis=1), -0.5)
    dm = jnp.diag(d)
    adj = jnp.matmul(jnp.matmul(a, dm).T, dm)
    x = x + gcn(x, params['static_weight'], adj[None])

    # dynamic graph construction
    x_glb = jnp.mean(x, axis=2, keepdims=True)
    w1 = params['conv_global_w'][:, :, 0]
    x_glb = jnp.einsum('oc,bcl->bol', w1, x_glb) + params['conv_global_b'][None, :, None]
    x_glb = (x_glb - params['bn_global_rm'][None, :, None]) * jax.lax.rsqrt(
        params['bn_global_rv'][None, :, None] + BN_EPS)
    x_glb = x_glb * params['bn_global_g'][None, :, None] + params['bn_global_b'][None, :, None]
    x_glb = jnp.where(x_glb > 0, x_glb, NEG_SLOPE * x_glb)
    x_glb = jnp.broadcast_to(x_glb, (B, C, N))
    cat = jnp.concatenate([x_glb, x], axis=1)
    w2 = params['conv_co_w'][:, :, 0]
    dyn = jnp.einsum('nc,bcm->bnm', w2, cat) + params['conv_co_b'][None, :, None]
    dyn = (dyn - jnp.min(dyn)) / (jnp.max(dyn) - jnp.min(dyn))

    # adjacency loss
    t1 = jnp.einsum('bn,bnm->bm', out1, dyn) / N
    loss = jnp.sum(jnp.sqrt(jnp.sum((out1 - t1) ** 2, axis=1)))

    # dynamic GCN
    dd = jnp.power(jnp.sum(dyn, axis=2), -0.5)
    adjs = dd[:, :, None] * jnp.swapaxes(dyn, 1, 2) * dd[:, None, :]
    out = gcn(x, params['dynamic_weight'], adjs)
    out = jnp.where(out > 0, out, NEG_SLOPE * out)
    return out, loss


# ----------------------------------------------------------------------------
# Deterministic parameter init (shapes follow the PyTorch __init__)
# ----------------------------------------------------------------------------
def init_params(key, in_features, out_features, num_nodes):
    ks = jax.random.split(key, 8)
    stdv = 1.0 / math.sqrt(out_features)
    k_cg = 1.0 / math.sqrt(in_features)          # conv_global fan_in
    k_co = 1.0 / math.sqrt(2 * in_features)      # conv_create_co_mat fan_in
    return {
        # adj_param holds adjList directly (norm_method == 'standard'); strictly
        # positive so rowsum^-0.5 and min/max normalization stay finite.
        'adj_param': jax.random.uniform(ks[0], (num_nodes, num_nodes), jnp.float32,
                                        minval=0.05, maxval=1.0),
        'static_weight': jax.random.uniform(ks[1], (in_features, out_features),
                                            jnp.float32, minval=-stdv, maxval=stdv),
        'dynamic_weight': jax.random.uniform(ks[2], (in_features, out_features),
                                             jnp.float32, minval=-stdv, maxval=stdv),
        'conv_global_w': jax.random.uniform(ks[3], (in_features, in_features, 1),
                                            jnp.float32, minval=-k_cg, maxval=k_cg),
        'conv_global_b': jax.random.uniform(ks[4], (in_features,), jnp.float32,
                                            minval=-k_cg, maxval=k_cg),
        'bn_global_g': jnp.ones((in_features,), jnp.float32),
        'bn_global_b': jnp.zeros((in_features,), jnp.float32),
        'bn_global_rm': jnp.zeros((in_features,), jnp.float32),
        'bn_global_rv': jnp.ones((in_features,), jnp.float32),
        'conv_co_w': jax.random.uniform(ks[5], (num_nodes, 2 * in_features, 1),
                                        jnp.float32, minval=-k_co, maxval=k_co),
        'conv_co_b': jax.random.uniform(ks[6], (num_nodes,), jnp.float32,
                                        minval=-k_co, maxval=k_co),
    }


if __name__ == "__main__":
    B, C, N = 2, 32, 8           # batch, in_features (== out_features), num_nodes
    key = jax.random.PRNGKey(0)
    kp, kx, ko = jax.random.split(key, 3)

    params = init_params(kp, in_features=C, out_features=C, num_nodes=N)
    x = jax.random.normal(kx, (B, C, N), jnp.float32)
    out1 = jax.random.normal(ko, (B, N), jnp.float32)

    # one-time packing, OUTSIDE the jitted forward (parameter-load time)
    packed = pack_params(params)
    jax.block_until_ready(packed)

    forward_pallas = jax.jit(dgc_forward_pallas)
    out, loss = forward_pallas(packed, x, out1)
    jax.block_until_ready((out, loss))

    # sanity check against the pure-JAX reference
    out_r, loss_r = dgc_forward_ref(params, x, out1)
    assert out.shape == (B, C, N)
    assert jnp.allclose(out, out_r, rtol=2e-3, atol=2e-3)
    assert jnp.allclose(loss, loss_r, rtol=2e-3, atol=2e-3)

    print("KERNEL_OK")
</pallas_src>

<mosaic_0001>
module attributes {stable_mosaic.version = 11 : i64} {
  func.func @_dgc_fused_kernel(%arg0: memref<2x32x8xf32, #tpu.memory_space<vmem>>, %arg1: memref<2x8xf32, #tpu.memory_space<vmem>>, %arg2: memref<96x32xf32, #tpu.memory_space<vmem>>, %arg3: memref<32x1xf32, #tpu.memory_space<vmem>>, %arg4: memref<8x73xf32, #tpu.memory_space<vmem>>, %arg5: memref<2x32x8xf32, #tpu.memory_space<vmem>>, %arg6: memref<1x1xf32, #tpu.memory_space<vmem>>) attributes {dimension_semantics = [], scalar_prefetch = 0 : i64, scratch_operands = 0 : i64, tpu.core_type = #tpu.core_type<tc>} {
    %c0 = arith.constant 0 : index
    %c0_0 = arith.constant 0 : index
    %0 = vector.load %arg2[%c0, %c0_0] : memref<96x32xf32, #tpu.memory_space<vmem>>, vector<96x32xf32>
    %1 = vector.extract_strided_slice %0 {offsets = [0, 0], sizes = [32, 32], strides = [1, 1]} : vector<96x32xf32> to vector<32x32xf32>
    %2 = vector.extract_strided_slice %0 {offsets = [32, 0], sizes = [32, 32], strides = [1, 1]} : vector<96x32xf32> to vector<32x32xf32>
    %3 = vector.extract_strided_slice %0 {offsets = [64, 0], sizes = [32, 32], strides = [1, 1]} : vector<96x32xf32> to vector<32x32xf32>
    %c0_1 = arith.constant 0 : index
    %c0_2 = arith.constant 0 : index
    %4 = vector.load %arg3[%c0_1, %c0_2] : memref<32x1xf32, #tpu.memory_space<vmem>>, vector<32x1xf32>
    %c0_3 = arith.constant 0 : index
    %c0_4 = arith.constant 0 : index
    %5 = vector.load %arg4[%c0_3, %c0_4] : memref<8x73xf32, #tpu.memory_space<vmem>>, vector<8x73xf32>
    %6 = vector.extract_strided_slice %5 {offsets = [0, 0], sizes = [8, 64], strides = [1, 1]} : vector<8x73xf32> to vector<8x64xf32>
    %7 = vector.extract_strided_slice %5 {offsets = [0, 64], sizes = [8, 8], strides = [1, 1]} : vector<8x73xf32> to vector<8x8xf32>
    %8 = vector.extract_strided_slice %5 {offsets = [0, 72], sizes = [8, 1], strides = [1, 1]} : vector<8x73xf32> to vector<8x1xf32>
    %9 = vector.shape_cast %7 : vector<8x8xf32> to vector<1x8x8xf32>
    %cst = arith.constant dense<0x7F800000> : vector<1xf32>
    %10 = vector.multi_reduction <minimumf>, %9, %cst [1, 2] : vector<1x8x8xf32> to vector<1xf32>
    %11 = vector.shape_cast %10 : vector<1xf32> to vector<1x1x1xf32>
    %12 = vector.extract %11[0, 0, 0] : f32 from vector<1x1x1xf32>
    %13 = vector.broadcast %12 : f32 to vector<1x1xf32>
    %14 = vector.shape_cast %7 : vector<8x8xf32> to vector<1x8x8xf32>
    %cst_5 = arith.constant dense<0xFF800000> : vector<1xf32>
    %15 = vector.multi_reduction <maximumf>, %14, %cst_5 [1, 2] : vector<1x8x8xf32> to vector<1xf32>
    %16 = vector.shape_cast %15 : vector<1xf32> to vector<1x1x1xf32>
    %17 = vector.extract %16[0, 0, 0] : f32 from vector<1x1x1xf32>
    %18 = vector.broadcast %17 : f32 to vector<1x1xf32>
    %19 = vector.broadcast %13 : vector<1x1xf32> to vector<8x8xf32>
    %20 = arith.subf %7, %19 : vector<8x8xf32>
    %21 = arith.subf %18, %13 : vector<1x1xf32>
    %22 = vector.broadcast %21 : vector<1x1xf32> to vector<8x8xf32>
    %23 = arith.divf %20, %22 : vector<8x8xf32>
    %cst_6 = arith.constant dense<0.000000e+00> : vector<8xf32>
    %24 = vector.multi_reduction <add>, %23, %cst_6 [1] : vector<8x8xf32> to vector<8xf32>
    %25 = vector.shape_cast %24 : vector<8xf32> to vector<8x1xf32>
    %26 = math.rsqrt %25 : vector<8x1xf32>
    %27 = vector.shape_cast %26 : vector<8x1xf32> to vector<8x1xf32>
    %28 = vector.broadcast %27 : vector<8x1xf32> to vector<8x8xf32>
    %29 = arith.mulf %23, %28 : vector<8x8xf32>
    %30 = tpu.transpose %28, [1, 0] : vector<8x8xf32> -> vector<8x8xf32>
    %31 = arith.mulf %29, %30 : vector<8x8xf32>
    %c0_7 = arith.constant 0 : index
    %c0_8 = arith.constant 0 : index
    %c0_9 = arith.constant 0 : index
    %32 = vector.load %arg0[%c0_7, %c0_8, %c0_9] : memref<2x32x8xf32, #tpu.memory_space<vmem>>, vector<1x32x8xf32>
    %33 = vector.shape_cast %32 : vector<1x32x8xf32> to vector<32x8xf32>
    %c1 = arith.constant 1 : index
    %c0_10 = arith.constant 0 : index
    %c0_11 = arith.constant 0 : index
    %34 = vector.load %arg0[%c1, %c0_10, %c0_11] : memref<2x32x8xf32, #tpu.memory_space<vmem>>, vector<1x32x8xf32>
    %35 = vector.shape_cast %34 : vector<1x32x8xf32> to vector<32x8xf32>
    %36 = tpu.concatenate %33, %35 in 1 : vector<32x8xf32>, vector<32x8xf32> -> vector<32x16xf32>
    %cst_12 = arith.constant 0.000000e+00 : f32
    %37 = vector.broadcast %cst_12 : f32 to vector<8x8xf32>
    %38 = tpu.concatenate %31, %37 in 1 : vector<8x8xf32>, vector<8x8xf32> -> vector<8x16xf32>
    %39 = tpu.concatenate %37, %31 in 1 : vector<8x8xf32>, vector<8x8xf32> -> vector<8x16xf32>
    %40 = tpu.concatenate %38, %39 in 0 : vector<8x16xf32>, vector<8x16xf32> -> vector<16x16xf32>
    %cst_13 = arith.constant dense<0.000000e+00> : vector<32x16xf32>
    %41 = tpu.matmul %36, %40, %cst_13 {dimension_numbers = #tpu.dot_dimension_numbers<[1], [0], [0], [1], [0, 0, 1, 1], [], []>} : vector<32x16xf32>, vector<16x16xf32>, vector<32x16xf32> -> vector<32x16xf32>
    %cst_14 = arith.constant 0.000000e+00 : f32
    %42 = vector.broadcast %cst_14 : f32 to vector<32x16xf32>
    %43 = arith.cmpf ogt, %41, %42 : vector<32x16xf32>
    %cst_15 = arith.constant 2.000000e-01 : f32
    %44 = vector.broadcast %cst_15 : f32 to vector<32x16xf32>
    %45 = arith.mulf %44, %41 : vector<32x16xf32>
    %46 = arith.select %43, %41, %45 : vector<32x16xi1>, vector<32x16xf32>
    %cst_16 = arith.constant dense<0.000000e+00> : vector<32x16xf32>
    %47 = tpu.matmul %1, %46, %cst_16 {dimension_numbers = #tpu.dot_dimension_numbers<[1], [0], [0], [1], [0, 0, 1, 1], [], []>} : vector<32x32xf32>, vector<32x16xf32>, vector<32x16xf32> -> vector<32x16xf32>
    %48 = arith.addf %36, %47 : vector<32x16xf32>
    %cst_17 = arith.constant 1.250000e-01 : f32
    %49 = vector.broadcast %cst_17 : f32 to vector<8x8xf32>
    %cst_18 = arith.constant 0.000000e+00 : f32
    %50 = vector.broadcast %cst_18 : f32 to vector<8x8xf32>
    %51 = tpu.concatenate %49, %50 in 1 : vector<8x8xf32>, vector<8x8xf32> -> vector<8x16xf32>
    %52 = tpu.concatenate %50, %49 in 1 : vector<8x8xf32>, vector<8x8xf32> -> vector<8x16xf32>
    %53 = tpu.concatenate %51, %52 in 0 : vector<8x16xf32>, vector<8x16xf32> -> vector<16x16xf32>
    %cst_19 = arith.constant dense<0.000000e+00> : vector<32x16xf32>
    %54 = tpu.matmul %48, %53, %cst_19 {dimension_numbers = #tpu.dot_dimension_numbers<[1], [0], [0], [1], [0, 0, 1, 1], [], []>} : vector<32x16xf32>, vector<16x16xf32>, vector<32x16xf32> -> vector<32x16xf32>
    %cst_20 = arith.constant dense<0.000000e+00> : vector<32x16xf32>
    %55 = tpu.matmul %3, %54, %cst_20 {dimension_numbers = #tpu.dot_dimension_numbers<[1], [0], [0], [1], [0, 0, 1, 1], [], []>} : vector<32x32xf32>, vector<32x16xf32>, vector<32x16xf32> -> vector<32x16xf32>
    %56 = vector.broadcast %4 : vector<32x1xf32> to vector<32x16xf32>
    %57 = arith.addf %55, %56 : vector<32x16xf32>
    %cst_21 = arith.constant 0.000000e+00 : f32
    %58 = vector.broadcast %cst_21 : f32 to vector<32x16xf32>
    %59 = arith.cmpf ogt, %57, %58 : vector<32x16xf32>
    %cst_22 = arith.constant 2.000000e-01 : f32
    %60 = vector.broadcast %cst_22 : f32 to vector<32x16xf32>
    %61 = arith.mulf %60, %57 : vector<32x16xf32>
    %62 = arith.select %59, %57, %61 : vector<32x16xi1>, vector<32x16xf32>
    %63 = tpu.concatenate %62, %48 in 0 : vector<32x16xf32>, vector<32x16xf32> -> vector<64x16xf32>
    %cst_23 = arith.constant dense<0.000000e+00> : vector<8x16xf32>
    %64 = tpu.matmul %6, %63, %cst_23 {dimension_numbers = #tpu.dot_dimension_numbers<[1], [0], [0], [1], [0, 0, 1, 1], [], []>} : vector<8x64xf32>, vector<64x16xf32>, vector<8x16xf32> -> vector<8x16xf32>
    %65 = vector.broadcast %8 : vector<8x1xf32> to vector<8x16xf32>
    %66 = arith.addf %64, %65 : vector<8x16xf32>
    %67 = vector.shape_cast %66 : vector<8x16xf32> to vector<1x8x16xf32>
    %cst_24 = arith.constant dense<0x7F800000> : vector<1xf32>
    %68 = vector.multi_reduction <minimumf>, %67, %cst_24 [1, 2] : vector<1x8x16xf32> to vector<1xf32>
    %69 = vector.shape_cast %68 : vector<1xf32> to vector<1x1x1xf32>
    %70 = vector.extract %69[0, 0, 0] : f32 from vector<1x1x1xf32>
    %71 = vector.broadcast %70 : f32 to vector<1x1xf32>
    %72 = vector.shape_cast %66 : vector<8x16xf32> to vector<1x8x16xf32>
    %cst_25 = arith.constant dense<0xFF800000> : vector<1xf32>
    %73 = vector.multi_reduction <maximumf>, %72, %cst_25 [1, 2] : vector<1x8x16xf32> to vector<1xf32>
    %74 = vector.shape_cast %73 : vector<1xf32> to vector<1x1x1xf32>
    %75 = vector.extract %74[0, 0, 0] : f32 from vector<1x1x1xf32>
    %76 = vector.broadcast %75 : f32 to vector<1x1xf32>
    %77 = vector.broadcast %71 : vector<1x1xf32> to vector<8x16xf32>
    %78 = arith.subf %66, %77 : vector<8x16xf32>
    %79 = arith.subf %76, %71 : vector<1x1xf32>
    %80 = vector.broadcast %79 : vector<1x1xf32> to vector<8x16xf32>
    %81 = arith.divf %78, %80 : vector<8x16xf32>
    %82 = vector.extract_strided_slice %81 {offsets = [0, 0], sizes = [8, 8], strides = [1, 1]} : vector<8x16xf32> to vector<8x8xf32>
    %83 = vector.extract_strided_slice %81 {offsets = [0, 8], sizes = [8, 8], strides = [1, 1]} : vector<8x16xf32> to vector<8x8xf32>
    %cst_26 = arith.constant 0.000000e+00 : f32
    %84 = vector.broadcast %cst_26 : f32 to vector<8x8xf32>
    %85 = tpu.concatenate %82, %84 in 1 : vector<8x8xf32>, vector<8x8xf32> -> vector<8x16xf32>
    %86 = tpu.concatenate %84, %83 in 1 : vector<8x8xf32>, vector<8x8xf32> -> vector<8x16xf32>
    %87 = tpu.concatenate %85, %86 in 0 : vector<8x16xf32>, vector<8x16xf32> -> vector<16x16xf32>
    %c0_27 = arith.constant 0 : index
    %c0_28 = arith.constant 0 : index
    %88 = vector.load %arg1[%c0_27, %c0_28] : memref<2x8xf32, #tpu.memory_space<vmem>>, vector<2x8xf32>
    %89 = vector.extract_strided_slice %88 {offsets = [0, 0], sizes = [1, 8], strides = [1, 1]} : vector<2x8xf32> to vector<1x8xf32>
    %90 = vector.extract_strided_slice %88 {offsets = [1, 0], sizes = [1, 8], strides = [1, 1]} : vector<2x8xf32> to vector<1x8xf32>
    %cst_29 = arith.constant 0.000000e+00 : f32
    %91 = vector.broadcast %cst_29 : f32 to vector<1x8xf32>
    %92 = tpu.concatenate %89, %91 in 1 : vector<1x8xf32>, vector<1x8xf32> -> vector<1x16xf32>
    %93 = tpu.concatenate %91, %90 in 1 : vector<1x8xf32>, vector<1x8xf32> -> vector<1x16xf32>
    %94 = tpu.concatenate %92, %93 in 0 : vector<1x16xf32>, vector<1x16xf32> -> vector<2x16xf32>
    %cst_30 = arith.constant dense<0.000000e+00> : vector<2x16xf32>
    %95 = tpu.matmul %94, %87, %cst_30 {dimension_numbers = #tpu.dot_dimension_numbers<[1], [0], [0], [1], [0, 0, 1, 1], [], []>} : vector<2x16xf32>, vector<16x16xf32>, vector<2x16xf32> -> vector<2x16xf32>
    %cst_31 = arith.constant 1.250000e-01 : f32
    %96 = vector.broadcast %cst_31 : f32 to vector<2x16xf32>
    %97 = arith.mulf %95, %96 : vector<2x16xf32>
    %98 = arith.subf %94, %97 : vector<2x16xf32>
    %99 = arith.mulf %98, %98 : vector<2x16xf32>
    %cst_32 = arith.constant dense<0.000000e+00> : vector<2xf32>
    %100 = vector.multi_reduction <add>, %99, %cst_32 [1] : vector<2x16xf32> to vector<2xf32>
    %101 = vector.shape_cast %100 : vector<2xf32> to vector<2x1xf32>
    %102 = math.sqrt %101 : vector<2x1xf32>
    %cst_33 = arith.constant dense<0.000000e+00> : vector<1xf32>
    %103 = vector.multi_reduction <add>, %102, %cst_33 [0] : vector<2x1xf32> to vector<1xf32>
    %104 = vector.shape_cast %103 : vector<1xf32> to vector<1x1xf32>
    %c0_34 = arith.constant 0 : index
    %c0_35 = arith.constant 0 : index
    %105 = vector.load %arg6[%c0_34, %c0_35] : memref<1x1xf32, #tpu.memory_space<vmem>>, vector<1x1xf32>
    tpu.vector_store %arg6[%c0_34, %c0_35], %104 {strides = array<i32>} : memref<1x1xf32, #tpu.memory_space<vmem>>, vector<1x1xf32>,
    %cst_36 = arith.constant dense<0.000000e+00> : vector<16xf32>
    %106 = vector.multi_reduction <add>, %87, %cst_36 [1] : vector<16x16xf32> to vector<16xf32>
    %107 = vector.shape_cast %106 : vector<16xf32> to vector<16x1xf32>
    %108 = math.rsqrt %107 : vector<16x1xf32>
    %109 = vector.shape_cast %108 : vector<16x1xf32> to vector<16x1xf32>
    %110 = vector.broadcast %109 : vector<16x1xf32> to vector<16x16xf32>
    %111 = arith.mulf %87, %110 : vector<16x16xf32>
    %112 = tpu.transpose %110, [1, 0] : vector<16x16xf32> -> vector<16x16xf32>
    %113 = arith.mulf %111, %112 : vector<16x16xf32>
    %cst_37 = arith.constant dense<0.000000e+00> : vector<32x16xf32>
    %114 = tpu.matmul %48, %113, %cst_37 {dimension_numbers = #tpu.dot_dimension_numbers<[1], [0], [0], [1], [0, 0, 1, 1], [], []>} : vector<32x16xf32>, vector<16x16xf32>, vector<32x16xf32> -> vector<32x16xf32>
    %cst_38 = arith.constant 0.000000e+00 : f32
    %115 = vector.broadcast %cst_38 : f32 to vector<32x16xf32>
    %116 = arith.cmpf ogt, %114, %115 : vector<32x16xf32>
    %cst_39 = arith.constant 2.000000e-01 : f32
    %117 = vector.broadcast %cst_39 : f32 to vector<32x16xf32>
    %118 = arith.mulf %117, %114 : vector<32x16xf32>
    %119 = arith.select %116, %114, %118 : vector<32x16xi1>, vector<32x16xf32>
    %cst_40 = arith.constant dense<0.000000e+00> : vector<32x16xf32>
    %120 = tpu.matmul %2, %119, %cst_40 {dimension_numbers = #tpu.dot_dimension_numbers<[1], [0], [0], [1], [0, 0, 1, 1], [], []>} : vector<32x32xf32>, vector<32x16xf32>, vector<32x16xf32> -> vector<32x16xf32>
    %cst_41 = arith.constant 0.000000e+00 : f32
    %121 = vector.broadcast %cst_41 : f32 to vector<32x16xf32>
    %122 = arith.cmpf ogt, %120, %121 : vector<32x16xf32>
    %cst_42 = arith.constant 2.000000e-01 : f32
    %123 = vector.broadcast %cst_42 : f32 to vector<32x16xf32>
    %124 = arith.mulf %123, %120 : vector<32x16xf32>
    %125 = arith.select %122, %120, %124 : vector<32x16xi1>, vector<32x16xf32>
    %126 = vector.extract_strided_slice %125 {offsets = [0, 0], sizes = [32, 8], strides = [1, 1]} : vector<32x16xf32> to vector<32x8xf32>
    %c0_43 = arith.constant 0 : index
    %c0_44 = arith.constant 0 : index
    %c0_45 = arith.constant 0 : index
    %127 = vector.load %arg5[%c0_43, %c0_44, %c0_45] : memref<2x32x8xf32, #tpu.memory_space<vmem>>, vector<1x32x8xf32>
    %128 = vector.shape_cast %127 : vector<1x32x8xf32> to vector<32x8xf32>
    %129 = vector.shape_cast %126 : vector<32x8xf32> to vector<1x32x8xf32>
    tpu.vector_store %arg5[%c0_43, %c0_44, %c0_45], %129 {strides = array<i32>} : memref<2x32x8xf32, #tpu.memory_space<vmem>>, vector<1x32x8xf32>,
    %130 = vector.extract_strided_slice %125 {offsets = [0, 8], sizes = [32, 8], strides = [1, 1]} : vector<32x16xf32> to vector<32x8xf32>
    %c1_46 = arith.constant 1 : index
    %c0_47 = arith.constant 0 : index
    %c0_48 = arith.constant 0 : index
    %131 = vector.load %arg5[%c1_46, %c0_47, %c0_48] : memref<2x32x8xf32, #tpu.memory_space<vmem>>, vector<1x32x8xf32>
    %132 = vector.shape_cast %131 : vector<1x32x8xf32> to vector<32x8xf32>
    %133 = vector.shape_cast %130 : vector<32x8xf32> to vector<1x32x8xf32>
    tpu.vector_store %arg5[%c1_46, %c0_47, %c0_48], %133 {strides = array<i32>} : memref<2x32x8xf32, #tpu.memory_space<vmem>>, vector<1x32x8xf32>,
    return
  }
}

</mosaic_0001>

<llo_original>
// kernel: dgc_forward_pallas.1
$region0: #{dgc_forward_pallas.1}
  #allocation0 [shape = 'u32[]', space=smem, size = 0x4, offset = 0x4, fixed_abs, tag = 'smem constant byte address 0x4 - core index']
  #allocation1 [shape = 'u32[72,128]{1,0:T(1,128)}', space=vmem, size = 0x9000, scoped, tag = 'internal scratch']
  %s0 = inlined_call_operand.vmem [shape: f32[2,32,8], index: 0, kind: input, shape index: {}]
  %s1 = inlined_call_operand.vmem [shape: f32[2,8], index: 1, kind: input, shape index: {}]
  %s2 = inlined_call_operand.vmem [shape: f32[96,32], index: 2, kind: input, shape index: {}]
  %s3 = inlined_call_operand.vmem [shape: f32[32,1], index: 3, kind: input, shape index: {}]
  %s4 = inlined_call_operand.vmem [shape: f32[8,73], index: 4, kind: input, shape index: {}]
  %s5 = inlined_call_operand.vmem [shape: f32[2,32,8], index: 5, kind: output, shape index: {0}]
  %s6 = inlined_call_operand.hbm [shape: f32[1,1], index: 6, kind: output, shape index: {1}]
  %7 = xla_tuple %s5, %s6
  %s8 = sld [smem:[#allocation0]]
  $region38: #{dgc_forward_pallas.1} parent=0
    _
  %s10 = ssub.s32 1, %s8
  %s11 = scalar_select 0, %s10, %s8
  $region1: #{dgc_forward_pallas.1} parent=0
    #allocation2 [shape = 'u8[512]{0}', space=vmem, size = 0x400, scoped, tag = 'output window, operand 1, single buffered']
    #allocation3 [shape = 's32[1]{0}', space=sflag, size = 0x4, scoped, tag = 'scoped memory for dgc_forward_pallas.1']
    %12 = vsyncpa [#allocation3], 0
    // Predicated region
    $region2: #{dgc_forward_pallas.1} parent=1 // pred_check
      _
    $region3: #{dgc_forward_pallas.1} parent=1 // pred_check_branch
      %14 = sbr.rel (0) target = $region5
    $region4: #{dgc_forward_pallas.1} parent=1 // pred_region
      _
    $region5: #{dgc_forward_pallas.1} parent=1 // pred_fallthru
      _
    // Predicated region
    $region6: #{dgc_forward_pallas.1} parent=1 // pred_check
      _
    $region7: #{dgc_forward_pallas.1} parent=1 // pred_check_branch
      %16 = sbr.rel (0) target = $region9
    $region8: #{dgc_forward_pallas.1} parent=1 // pred_region
      _
    $region9: #{dgc_forward_pallas.1} parent=1 // pred_fallthru
      _
    // Predicated region
    $region10: #{dgc_forward_pallas.1} parent=1 // pred_check
      _
    $region11: #{dgc_forward_pallas.1} parent=1 // pred_check_branch
      %18 = sbr.rel (0) target = $region13
    $region12: #{dgc_forward_pallas.1} parent=1 // pred_region
      _
    $region13: #{dgc_forward_pallas.1} parent=1 // pred_fallthru
      _
    // Predicated region
    $region14: #{dgc_forward_pallas.1} parent=1 // pred_check
      _
    $region15: #{dgc_forward_pallas.1} parent=1 // pred_check_branch
      %20 = sbr.rel (0) target = $region17
    $region16: #{dgc_forward_pallas.1} parent=1 // pred_region
      _
    $region17: #{dgc_forward_pallas.1} parent=1 // pred_fallthru
      _
    // Predicated region
    $region18: #{dgc_forward_pallas.1} parent=1 // pred_check
      _
    $region19: #{dgc_forward_pallas.1} parent=1 // pred_check_branch
      %22 = sbr.rel (0) target = $region21
    $region20: #{dgc_forward_pallas.1} parent=1 // pred_region
      _
    $region21: #{dgc_forward_pallas.1} parent=1 // pred_fallthru
      _
    %v23 = vld [vmem:[%s2] sm:$0xff]
    %v24 = vld [vmem:[%s2 + $0x8] sm:$0xff]
    %v25 = vld [vmem:[%s2 + $0x10] sm:$0xff]
    %v26 = vld [vmem:[%s2 + $0x18] sm:$0xff]
    %v27 = vld [vmem:[%s2 + $0x20] sm:$0xff]
    %v28 = vld [vmem:[%s2 + $0x28] sm:$0xff]
    %v29 = vld [vmem:[%s2 + $0x30] sm:$0xff]
    %v30 = vld [vmem:[%s2 + $0x38] sm:$0xff]
    %v31 = vld [vmem:[%s2 + $0x40] sm:$0xff]
    %v32 = vld [vmem:[%s2 + $0x48] sm:$0xff]
    %v33 = vld [vmem:[%s2 + $0x50] sm:$0xff]
    %v34 = vld [vmem:[%s2 + $0x58] sm:$0xff]
    %v35 = vld [vmem:[%s3] sm:$0xff]
    %v36 = vld [vmem:[%s3 + $0x8] sm:$0xff]
    %v37 = vld [vmem:[%s3 + $0x10] sm:$0xff]
    %v38 = vld [vmem:[%s3 + $0x18] sm:$0xff]
    %v39 = vld [vmem:[%s4] sm:$0xff]
    %vm40 = vcmask 589312
    %v41 = vsel %vm40, %v39, inf
    %42 = vmin.xlane.f32.xlu0 %v41
    %v43 = vpop.xlane.xlu0 %42
    %v44 = vrot.slane %v43, 4
    %v45 = vmin.f32 %v43, %v44
    %v46 = vrot.slane %v45, 2
    %v47 = vmin.f32 %v45, %v46
    %v48 = vrot.slane %v47, 1
    %v49 = vmin.f32 %v47, %v48
    %s50 = vtos %v49
    %v51 = vstv %s50
    %v52 = vsel %vm40, %v39, -inf
    %53 = vmax.xlane.f32.xlu0 %v52
    %v54 = vpop.xlane.xlu0 %53
    %v55 = vrot.slane %v54, 4
    %v56 = vmax.f32 %v54, %v55
    %v57 = vrot.slane %v56, 2
    %v58 = vmax.f32 %v56, %v57
    %v59 = vrot.slane %v58, 1
    %v60 = vmax.f32 %v58, %v59
    %s61 = vtos %v60
    %v62 = vstv %s61
    %v63 = vsub.f32 %v39, %v51
    %v64 = vsub.f32 %v62, %v51
    %v65 = vrcp.pop %v64
    %v66 = vmul.f32 %v64, %v65
    %v67 = vsub.f32 1.0, %v66
    %v68 = vmul.f32 %v65, %v67
    %v69 = vadd.f32 %v65, %v68
    %vm70 = vweird.f32 %v64
    %vm71 = vweird.f32 %v65
    %vm72 = vmor %vm70, %vm71
    %v73 = vsel %vm72, %v65, %v69
    %v74 = vand.u32 2147483647, %v64
    %vm75 = vcmp.eq.f32.partialorder %v74, 8.507059e+37
    %v76 = vand.u32 %v64, 2147483648
    %v77 = vor.u32 1.1754944e-38, %v76
    %v78 = vsel %vm75, %v77, %v73
    %v79 = vmul.f32 %v63, %v78
    %81 = vrot.lane.b32.xlu0 %v79, 64
    %v82 = vpop.permute.xlu0 %81
    %vm84 = vcmask 64512
    %v85 = vsel %vm84, %v82, 0.0
    %86 = vadd.xlane.f32.xlu0 %v85
    %v87 = vpop.xlane.xlu0 %86
    %v88 = vrsqrt.pop %v87
    %v89 = vmul.f32 %v88, %v87
    %v90 = vmul.f32 %v89, %v88
    %v91 = vmul.f32 0.5, %v90
    %v92 = vsub.f32 1.5, %v91
    %v93 = vmul.f32 %v88, %v92
    %vm94 = vweird.f32 %v87
    %vm95 = vweird.f32 %v88
    %vm96 = vmor %vm94, %vm95
    %v97 = vsel %vm96, %v88, %v93
    %v98 = vmul.f32 %v79, %v97
    %99 = vxpose.xlu0.b32.start [1/16] %v97, 128
    %100 = vxpose.xlu0.b32.cont [2/16] 0.0, 128
    %101 = vxpose.xlu0.b32.cont [3/16] 0.0, 128
    %102 = vxpose.xlu0.b32.cont [4/16] 0.0, 128
    %103 = vxpose.xlu0.b32.cont [5/16] 0.0, 128
    %104 = vxpose.xlu0.b32.cont [6/16] 0.0, 128
    %105 = vxpose.xlu0.b32.cont [7/16] 0.0, 128
    %106 = vxpose.xlu0.b32.cont [8/16] 0.0, 128
    %107 = vxpose.xlu0.b32.cont [9/16] 0.0, 128
    %108 = vxpose.xlu0.b32.cont [10/16] 0.0, 128
    %109 = vxpose.xlu0.b32.cont [11/16] 0.0, 128
    %110 = vxpose.xlu0.b32.cont [12/16] 0.0, 128
    %111 = vxpose.xlu0.b32.cont [13/16] 0.0, 128
    %112 = vxpose.xlu0.b32.cont [14/16] 0.0, 128
    %113 = vxpose.xlu0.b32.cont [15/16] 0.0, 128
    %114 = vxpose.xlu0.b32.end [16/16] 0.0, 128
    %v115 = vpop.trf.xlu0
    %v116 = vpop.trf.xlu0
    %v117 = vpop.trf.xlu0
    %v118 = vpop.trf.xlu0
    %v119 = vpop.trf.xlu0
    %v120 = vpop.trf.xlu0
    %v121 = vpop.trf.xlu0
    %v122 = vpop.trf.xlu0
    %v123 = vpop.trf.xlu0
    %v124 = vpop.trf.xlu0
    %v125 = vpop.trf.xlu0
    %v126 = vpop.trf.xlu0
    %v127 = vpop.trf.xlu0
    %v128 = vpop.trf.xlu0
    %v129 = vpop.trf.xlu0
    %v130 = vpop.trf.xlu0
    %132 = vrot.lane.b32.xlu0 %v115, 64
    %v133 = vpop.permute.xlu0 %132
    %v135 = vmul.f32 %v98, %v133
    %v136 = vld [vmem:[%s0] sm:$0xff]
    %v137 = vld [vmem:[%s0 + $0x8] sm:$0xff]
    %v138 = vld [vmem:[%s0 + $0x10] sm:$0xff]
    %v139 = vld [vmem:[%s0 + $0x18] sm:$0xff]
    %s140 = scalar_lea.vmem %s0, 32
    %v141 = vld [vmem:[%s140] sm:$0xff]
    %v142 = vld [vmem:[%s140 + $0x8] sm:$0xff]
    %v143 = vld [vmem:[%s140 + $0x10] sm:$0xff]
    %v144 = vld [vmem:[%s140 + $0x18] sm:$0xff]
    %149 = vrot.lane.b32.xlu0 %v141, 8
    %v150 = vpop.permute.xlu0 %149
    %151 = vrot.lane.b32.xlu0 %v142, 8
    %v152 = vpop.permute.xlu0 %151
    %153 = vrot.lane.b32.xlu0 %v143, 8
    %v154 = vpop.permute.xlu0 %153
    %155 = vrot.lane.b32.xlu0 %v144, 8
    %v156 = vpop.permute.xlu0 %155
    %v161 = vsel %vm84, %v136, %v150
    %v162 = vsel %vm84, %v137, %v152
    %v163 = vsel %vm84, %v138, %v154
    %v164 = vsel %vm84, %v139, %v156
    %166 = vrot.lane.b32.xlu0 %v135, 64
    %v167 = vpop.permute.xlu0 %166
    %v169 = vsel %vm84, %v167, 0.0
    %170 = vrot.lane.b32.xlu0 %v135, 72
    %v171 = vpop.permute.xlu0 %170
    %v173 = vsel %vm84, 0.0, %v171
    %vm174 = vcmask 130048
    %v176 = vsel %vm174, %v161, 0
    %v179 = vsel %vm174, %v162, 0
    %v182 = vsel %vm174, %v163, 0
    %v185 = vsel %vm174, %v164, 0
    %187 = vmatpush.msra.mxu0 0.0
    %188 = vmatpush.msra.mxu0 0.0
    %189 = vmatpush.msra.mxu0 0.0
    %190 = vmatpush.msra.mxu0 0.0
    %191 = vmatpush.msra.mxu0 0.0
    %192 = vmatpush.msra.mxu0 0.0
    %193 = vmatpush.msra.mxu0 0.0
    %194 = vmatpush.msra.mxu0 0.0
    %195 = vmatpush.msra.mxu0 0.0
    %196 = vmatpush.msra.mxu0 0.0
    %197 = vmatpush.msra.mxu0 0.0
    %198 = vmatpush.msra.mxu0 0.0
    %199 = vmatpush.msra.mxu0 0.0
    %200 = vmatpush.msra.mxu0 0.0
    %201 = vmatpush.msra.mxu0 %v173
    %202 = vmatpush.msra.mxu0 %v169
    %203 = vmatmul.f32.gmra.mxu0 %v176
    %v204 = vpop.f32.mrf.mxu0
    %v205 = vadd.f32 0.0, %v204
    %206 = vmatmul.f32.gmra.mxu0 %v179
    %v207 = vpop.f32.mrf.mxu0
    %v208 = vadd.f32 0.0, %v207
    %209 = vmatmul.f32.gmra.mxu0 %v182
    %v210 = vpop.f32.mrf.mxu0
    %v211 = vadd.f32 0.0, %v210
    %212 = vmatmul.f32.gmra.mxu0 %v185
    %v213 = vpop.f32.mrf.mxu0
    %v214 = vadd.f32 0.0, %v213
    %215 = vdwg.mxu0
    %vm216 = vcmp.gt.f32.partialorder %v205, 0.0
    %vm217 = vcmp.gt.f32.partialorder %v208, 0.0
    %vm218 = vcmp.gt.f32.partialorder %v211, 0.0
    %vm219 = vcmp.gt.f32.partialorder %v214, 0.0
    %v220 = vmul.f32 %v205, 0.2
    %v221 = vmul.f32 %v208, 0.2
    %v222 = vmul.f32 %v211, 0.2
    %v223 = vmul.f32 %v214, 0.2
    %v224 = vsel %vm216, %v205, %v220
    %v225 = vsel %vm217, %v208, %v221
    %v226 = vsel %vm218, %v211, %v222
    %v227 = vsel %vm219, %v214, %v223
    %vm228 = vcmask 261120
    %v230 = vsel %vm228, %v23, 0
    %v233 = vsel %vm228, %v24, 0
    %v236 = vsel %vm228, %v25, 0
    %v239 = vsel %vm228, %v26, 0
    %241 = vmatpush.msra.mxu0 0.0
    %242 = vmatpush.msra.mxu0 0.0
    %243 = vmatpush.msra.mxu0 0.0
    %244 = vmatpush.msra.mxu0 0.0
    %245 = vmatpush.msra.mxu0 0.0
    %246 = vmatpush.msra.mxu0 0.0
    %247 = vmatpush.msra.mxu0 0.0
    %248 = vmatpush.msra.mxu0 0.0
    %249 = vmatpush.msra.mxu0 0.0
    %250 = vmatpush.msra.mxu0 0.0
    %251 = vmatpush.msra.mxu0 0.0
    %252 = vmatpush.msra.mxu0 0.0
    %253 = vmatpush.msra.mxu0 %v227
    %254 = vmatpush.msra.mxu0 %v226
    %255 = vmatpush.msra.mxu0 %v225
    %256 = vmatpush.msra.mxu0 %v224
    %257 = vmatmul.f32.gmra.mxu0 %v230
    %v258 = vpop.f32.mrf.mxu0
    %v259 = vadd.f32 0.0, %v258
    %260 = vmatmul.f32.gmra.mxu0 %v233
    %v261 = vpop.f32.mrf.mxu0
    %v262 = vadd.f32 0.0, %v261
    %263 = vmatmul.f32.gmra.mxu0 %v236
    %v264 = vpop.f32.mrf.mxu0
    %v265 = vadd.f32 0.0, %v264
    %266 = vmatmul.f32.gmra.mxu0 %v239
    %v267 = vpop.f32.mrf.mxu0
    %v268 = vadd.f32 0.0, %v267
    %269 = vdwg.mxu0
    %v270 = vadd.f32 %v161, %v259
    %v271 = vadd.f32 %v162, %v262
    %v272 = vadd.f32 %v163, %v265
    %v273 = vadd.f32 %v164, %v268
    %v274 = vsel %vm84, 0.125, 0.0
    %v275 = vsel %vm84, 0.0, 0.125
    %v277 = vsel %vm174, %v270, 0
    %v280 = vsel %vm174, %v271, 0
    %v283 = vsel %vm174, %v272, 0
    %v286 = vsel %vm174, %v273, 0
    %288 = vmatpush.msra.mxu0 0.0
    %289 = vmatpush.msra.mxu0 0.0
    %290 = vmatpush.msra.mxu0 0.0
    %291 = vmatpush.msra.mxu0 0.0
    %292 = vmatpush.msra.mxu0 0.0
    %293 = vmatpush.msra.mxu0 0.0
    %294 = vmatpush.msra.mxu0 0.0
    %295 = vmatpush.msra.mxu0 0.0
    %296 = vmatpush.msra.mxu0 0.0
    %297 = vmatpush.msra.mxu0 0.0
    %298 = vmatpush.msra.mxu0 0.0
    %299 = vmatpush.msra.mxu0 0.0
    %300 = vmatpush.msra.mxu0 0.0
    %301 = vmatpush.msra.mxu0 0.0
    %302 = vmatpush.msra.mxu0 %v275
    %303 = vmatpush.msra.mxu0 %v274
    %304 = vmatmul.f32.gmra.mxu0 %v277
    %v305 = vpop.f32.mrf.mxu0
    %v306 = vadd.f32 0.0, %v305
    %307 = vmatmul.f32.gmra.mxu0 %v280
    %v308 = vpop.f32.mrf.mxu0
    %v309 = vadd.f32 0.0, %v308
    %310 = vmatmul.f32.gmra.mxu0 %v283
    %v311 = vpop.f32.mrf.mxu0
    %v312 = vadd.f32 0.0, %v311
    %313 = vmatmul.f32.gmra.mxu0 %v286
    %v314 = vpop.f32.mrf.mxu0
    %v315 = vadd.f32 0.0, %v314
    %316 = vdwg.mxu0
    %318 = vset.pattern.permute.xlu0 0
    %319 = vperm.xlu0 %318, %v35
    %v320 = vpop.permute.xlu0 %319
    %323 = vset.pattern.permute.xlu0 0
    %324 = vperm.xlu0 %323, %v36
    %v325 = vpop.permute.xlu0 %324
    %328 = vset.pattern.permute.xlu0 0
    %329 = vperm.xlu0 %328, %v37
    %v330 = vpop.permute.xlu0 %329
    %333 = vset.pattern.permute.xlu0 0
    %334 = vperm.xlu0 %333, %v38
    %v335 = vpop.permute.xlu0 %334
    %v338 = vsel %vm228, %v31, 0
    %v341 = vsel %vm228, %v32, 0
    %v344 = vsel %vm228, %v33, 0
    %v347 = vsel %vm228, %v34, 0
    %349 = vmatpush.msra.mxu0 0.0
    %350 = vmatpush.msra.mxu0 0.0
    %351 = vmatpush.msra.mxu0 0.0
    %352 = vmatpush.msra.mxu0 0.0
    %353 = vmatpush.msra.mxu0 0.0
    %354 = vmatpush.msra.mxu0 0.0
    %355 = vmatpush.msra.mxu0 0.0
    %356 = vmatpush.msra.mxu0 0.0
    %357 = vmatpush.msra.mxu0 0.0
    %358 = vmatpush.msra.mxu0 0.0
    %359 = vmatpush.msra.mxu0 0.0
    %360 = vmatpush.msra.mxu0 0.0
    %361 = vmatpush.msra.mxu0 %v315
    %362 = vmatpush.msra.mxu0 %v312
    %363 = vmatpush.msra.mxu0 %v309
    %364 = vmatpush.msra.mxu0 %v306
    %365 = vmatmul.f32.gmra.mxu0 %v338
    %v366 = vpop.f32.mrf.mxu0
    %v367 = vadd.f32 %v320, %v366
    %368 = vmatmul.f32.gmra.mxu0 %v341
    %v369 = vpop.f32.mrf.mxu0
    %v370 = vadd.f32 %v325, %v369
    %371 = vmatmul.f32.gmra.mxu0 %v344
    %v372 = vpop.f32.mrf.mxu0
    %v373 = vadd.f32 %v330, %v372
    %374 = vmatmul.f32.gmra.mxu0 %v347
    %v375 = vpop.f32.mrf.mxu0
    %v376 = vadd.f32 %v335, %v375
    %377 = vdwg.mxu0
    %vm378 = vcmp.gt.f32.partialorder %v367, 0.0
    %vm379 = vcmp.gt.f32.partialorder %v370, 0.0
    %vm380 = vcmp.gt.f32.partialorder %v373, 0.0
    %vm381 = vcmp.gt.f32.partialorder %v376, 0.0
    %v382 = vmul.f32 %v367, 0.2
    %v383 = vmul.f32 %v370, 0.2
    %v384 = vmul.f32 %v373, 0.2
    %v385 = vmul.f32 %v376, 0.2
    %v386 = vsel %vm378, %v367, %v382
    %v387 = vsel %vm379, %v370, %v383
    %v388 = vsel %vm380, %v373, %v384
    %v389 = vsel %vm381, %v376, %v385
    %391 = vset.pattern.permute.xlu0 72
    %392 = vperm.xlu0 %391, %v39
    %v393 = vpop.permute.xlu0 %392
    %vm395 = vcmask 523264
    %v396 = vsel %vm395, %v39, 0
    %398 = vmatpush.msra.mxu0 0.0
    %399 = vmatpush.msra.mxu0 0.0
    %400 = vmatpush.msra.mxu0 0.0
    %401 = vmatpush.msra.mxu0 0.0
    %402 = vmatpush.msra.mxu0 0.0
    %403 = vmatpush.msra.mxu0 0.0
    %404 = vmatpush.msra.mxu0 0.0
    %405 = vmatpush.msra.mxu0 0.0
    %406 = vmatpush.msra.mxu0 %v273
    %407 = vmatpush.msra.mxu0 %v272
    %408 = vmatpush.msra.mxu0 %v271
    %409 = vmatpush.msra.mxu0 %v270
    %410 = vmatpush.msra.mxu0 %v389
    %411 = vmatpush.msra.mxu0 %v388
    %412 = vmatpush.msra.mxu0 %v387
    %413 = vmatpush.msra.mxu0 %v386
    %414 = vmatmul.f32.gmra.mxu0 %v396
    %v415 = vpop.f32.mrf.mxu0
    %v416 = vadd.f32 %v393, %v415
    %417 = vdwg.mxu0
    %v418 = vsel %vm174, %v416, inf
    %419 = vmin.xlane.f32.xlu0 %v418
    %v420 = vpop.xlane.xlu0 %419
    %v421 = vrot.slane %v420, 4
    %v422 = vmin.f32 %v420, %v421
    %v423 = vrot.slane %v422, 2
    %v424 = vmin.f32 %v422, %v423
    %v425 = vrot.slane %v424, 1
    %v426 = vmin.f32 %v424, %v425
    %s427 = vtos %v426
    %v428 = vstv %s427
    %v429 = vsel %vm174, %v416, -inf
    %430 = vmax.xlane.f32.xlu0 %v429
    %v431 = vpop.xlane.xlu0 %430
    %v432 = vrot.slane %v431, 4
    %v433 = vmax.f32 %v431, %v432
    %v434 = vrot.slane %v433, 2
    %v435 = vmax.f32 %v433, %v434
    %v436 = vrot.slane %v435, 1
    %v437 = vmax.f32 %v435, %v436
    %s438 = vtos %v437
    %v439 = vstv %s438
    %v440 = vsub.f32 %v416, %v428
    %v441 = vsub.f32 %v439, %v428
    %v442 = vrcp.pop %v441
    %v443 = vmul.f32 %v441, %v442
    %v444 = vsub.f32 1.0, %v443
    %v445 = vmul.f32 %v442, %v444
    %v446 = vadd.f32 %v442, %v445
    %vm447 = vweird.f32 %v441
    %vm448 = vweird.f32 %v442
    %vm449 = vmor %vm447, %vm448
    %v450 = vsel %vm449, %v442, %v446
    %v451 = vand.u32 2147483647, %v441
    %vm452 = vcmp.eq.f32.partialorder %v451, 8.507059e+37
    %v453 = vand.u32 %v441, 2147483648
    %v454 = vor.u32 1.1754944e-38, %v453
    %v455 = vsel %vm452, %v454, %v450
    %v456 = vmul.f32 %v440, %v455
    %v457 = vsel %vm84, %v456, 0.0
    %v458 = vsel %vm84, 0.0, %v456
    %v459 = vld [vmem:[%s1] sm:$0x3]
    %v460 = vsel %vm84, %v459, 0.0
    %v462 = vrot.slane %v459, 1
    %463 = vrot.lane.b32.xlu0 %v462, 8
    %v464 = vpop.permute.xlu0 %463
    %v466 = vsel %vm84, 0.0, %v464
    %v468 = vrot.slane %v466, 7
    %vm470 = vcmask 1040384
    %v471 = vsel %vm470, %v460, %v468
    %v473 = vsel %vm174, %v471, 0
    %475 = vmatpush.msra.mxu0 0.0
    %476 = vmatpush.msra.mxu0 0.0
    %477 = vmatpush.msra.mxu0 0.0
    %478 = vmatpush.msra.mxu0 0.0
    %479 = vmatpush.msra.mxu0 0.0
    %480 = vmatpush.msra.mxu0 0.0
    %481 = vmatpush.msra.mxu0 0.0
    %482 = vmatpush.msra.mxu0 0.0
    %483 = vmatpush.msra.mxu0 0.0
    %484 = vmatpush.msra.mxu0 0.0
    %485 = vmatpush.msra.mxu0 0.0
    %486 = vmatpush.msra.mxu0 0.0
    %487 = vmatpush.msra.mxu0 0.0
    %488 = vmatpush.msra.mxu0 0.0
    %489 = vmatpush.msra.mxu0 %v458
    %490 = vmatpush.msra.mxu0 %v457
    %491 = vmatmul.f32.gmra.mxu0 %v473
    %v492 = vpop.f32.mrf.mxu0
    %v493 = vadd.f32 0.0, %v492
    %494 = vdwg.mxu0
    %v495 = vmul.f32 %v493, 0.125
    %v496 = vsub.f32 %v471, %v495
    %v497 = vmul.f32 %v496, %v496
    %vm498 = vcmask 123904
    %v499 = vsel %vm498, %v497, 0.0
    %500 = vadd.xlane.f32.xlu0 %v499
    %v501 = vpop.xlane.xlu0 %500
    %v502 = vrsqrt.pop %v501
    %v503 = vmul.f32 %v502, %v501
    %v504 = vmul.f32 %v503, %v502
    %v505 = vmul.f32 0.5, %v504
    %v506 = vsub.f32 1.5, %v505
    %v507 = vmul.f32 %v502, %v506
    %v508 = vmul.f32 %v501, %v507
    %vm509 = vcmp.eq.f32.partialorder %v501, inf
    %v510 = vsel %vm509, %v501, %v508
    %vm511 = vcmp.eq.f32.partialorder %v501, 0.0
    %v512 = vand.u32 %v501, 2147483648
    %v513 = vsel %vm511, %v512, %v510
    %vm514 = vcmask 1041408
    %v515 = vsel %vm514, %v513, 0.0
    %v516 = vrot.slane %v515, 4
    %v517 = vadd.f32 %v515, %v516
    %v518 = vrot.slane %v517, 2
    %v519 = vadd.f32 %v517, %v518
    %v520 = vrot.slane %v519, 1
    %v521 = vadd.f32 %v519, %v520
    %vm522 = vcmask 0
    %523 = vst.msk [vmem:[#allocation2] sm:$0x1] %vm522, %v521
    %v524 = vsel %vm174, %v457, 0.0
    %525 = vadd.xlane.f32.xlu0 %v524
    %v526 = vpop.xlane.xlu0 %525
    %v527 = vsel %vm174, %v458, 0.0
    %528 = vadd.xlane.f32.xlu0 %v527
    %v529 = vpop.xlane.xlu0 %528
    %v530 = vrsqrt.pop %v526
    %v531 = vmul.f32 %v530, %v526
    %v532 = vmul.f32 %v531, %v530
    %v533 = vmul.f32 0.5, %v532
    %v534 = vsub.f32 1.5, %v533
    %v535 = vmul.f32 %v530, %v534
    %vm536 = vweird.f32 %v526
    %vm537 = vweird.f32 %v530
    %vm538 = vmor %vm536, %vm537
    %v539 = vsel %vm538, %v530, %v535
    %v540 = vrsqrt.pop %v529
    %v541 = vmul.f32 %v540, %v529
    %v542 = vmul.f32 %v541, %v540
    %v543 = vmul.f32 0.5, %v542
    %v544 = vsub.f32 1.5, %v543
    %v545 = vmul.f32 %v540, %v544
    %vm546 = vweird.f32 %v529
    %vm547 = vweird.f32 %v540
    %vm548 = vmor %vm546, %vm547
    %v549 = vsel %vm548, %v540, %v545
    %v550 = vmul.f32 %v457, %v539
    %v551 = vmul.f32 %v458, %v549
    %552 = vxpose.xlu0.b32.start [1/16] %v539, 128
    %553 = vxpose.xlu0.b32.cont [2/16] %v549, 128
    %554 = vxpose.xlu0.b32.cont [3/16] 0.0, 128
    %555 = vxpose.xlu0.b32.cont [4/16] 0.0, 128
    %556 = vxpose.xlu0.b32.cont [5/16] 0.0, 128
    %557 = vxpose.xlu0.b32.cont [6/16] 0.0, 128
    %558 = vxpose.xlu0.b32.cont [7/16] 0.0, 128
    %559 = vxpose.xlu0.b32.cont [8/16] 0.0, 128
    %560 = vxpose.xlu0.b32.cont [9/16] 0.0, 128
    %561 = vxpose.xlu0.b32.cont [10/16] 0.0, 128
    %562 = vxpose.xlu0.b32.cont [11/16] 0.0, 128
    %563 = vxpose.xlu0.b32.cont [12/16] 0.0, 128
    %564 = vxpose.xlu0.b32.cont [13/16] 0.0, 128
    %565 = vxpose.xlu0.b32.cont [14/16] 0.0, 128
    %566 = vxpose.xlu0.b32.cont [15/16] 0.0, 128
    %567 = vxpose.xlu0.b32.end [16/16] 0.0, 128
    %v568 = vpop.trf.xlu0
    %v569 = vpop.trf.xlu0
    %v570 = vpop.trf.xlu0
    %v571 = vpop.trf.xlu0
    %v572 = vpop.trf.xlu0
    %v573 = vpop.trf.xlu0
    %v574 = vpop.trf.xlu0
    %v575 = vpop.trf.xlu0
    %v576 = vpop.trf.xlu0
    %v577 = vpop.trf.xlu0
    %v578 = vpop.trf.xlu0
    %v579 = vpop.trf.xlu0
    %v580 = vpop.trf.xlu0
    %v581 = vpop.trf.xlu0
    %v582 = vpop.trf.xlu0
    %v583 = vpop.trf.xlu0
    %v584 = vmul.f32 %v550, %v568
    %v585 = vmul.f32 %v551, %v569
    %586 = vmatpush.msra.mxu0 0.0
    %587 = vmatpush.msra.mxu0 0.0
    %588 = vmatpush.msra.mxu0 0.0
    %589 = vmatpush.msra.mxu0 0.0
    %590 = vmatpush.msra.mxu0 0.0
    %591 = vmatpush.msra.mxu0 0.0
    %592 = vmatpush.msra.mxu0 0.0
    %593 = vmatpush.msra.mxu0 0.0
    %594 = vmatpush.msra.mxu0 0.0
    %595 = vmatpush.msra.mxu0 0.0
    %596 = vmatpush.msra.mxu0 0.0
    %597 = vmatpush.msra.mxu0 0.0
    %598 = vmatpush.msra.mxu0 0.0
    %599 = vmatpush.msra.mxu0 0.0
    %600 = vmatpush.msra.mxu0 %v585
    %601 = vmatpush.msra.mxu0 %v584
    %602 = vmatmul.f32.gmra.mxu0 %v277
    %v603 = vpop.f32.mrf.mxu0
    %v604 = vadd.f32 0.0, %v603
    %605 = vmatmul.f32.gmra.mxu0 %v280
    %v606 = vpop.f32.mrf.mxu0
    %v607 = vadd.f32 0.0, %v606
    %608 = vmatmul.f32.gmra.mxu0 %v283
    %v609 = vpop.f32.mrf.mxu0
    %v610 = vadd.f32 0.0, %v609
    %611 = vmatmul.f32.gmra.mxu0 %v286
    %v612 = vpop.f32.mrf.mxu0
    %v613 = vadd.f32 0.0, %v612
    %614 = vdwg.mxu0
    %vm615 = vcmp.gt.f32.partialorder %v604, 0.0
    %vm616 = vcmp.gt.f32.partialorder %v607, 0.0
    %vm617 = vcmp.gt.f32.partialorder %v610, 0.0
    %vm618 = vcmp.gt.f32.partialorder %v613, 0.0
    %v619 = vmul.f32 %v604, 0.2
    %v620 = vmul.f32 %v607, 0.2
    %v621 = vmul.f32 %v610, 0.2
    %v622 = vmul.f32 %v613, 0.2
    %v623 = vsel %vm615, %v604, %v619
    %v624 = vsel %vm616, %v607, %v620
    %v625 = vsel %vm617, %v610, %v621
    %v626 = vsel %vm618, %v613, %v622
    %v628 = vsel %vm228, %v27, 0
    %v631 = vsel %vm228, %v28, 0
    %v634 = vsel %vm228, %v29, 0
    %v637 = vsel %vm228, %v30, 0
    %639 = vmatpush.msra.mxu0 0.0
    %640 = vmatpush.msra.mxu0 0.0
    %641 = vmatpush.msra.mxu0 0.0
    %642 = vmatpush.msra.mxu0 0.0
    %643 = vmatpush.msra.mxu0 0.0
    %644 = vmatpush.msra.mxu0 0.0
    %645 = vmatpush.msra.mxu0 0.0
    %646 = vmatpush.msra.mxu0 0.0
    %647 = vmatpush.msra.mxu0 0.0
    %648 = vmatpush.msra.mxu0 0.0
    %649 = vmatpush.msra.mxu0 0.0
    %650 = vmatpush.msra.mxu0 0.0
    %651 = vmatpush.msra.mxu0 %v626
    %652 = vmatpush.msra.mxu0 %v625
    %653 = vmatpush.msra.mxu0 %v624
    %654 = vmatpush.msra.mxu0 %v623
    %655 = vmatmul.f32.gmra.mxu0 %v628
    %v656 = vpop.f32.mrf.mxu0
    %v657 = vadd.f32 0.0, %v656
    %658 = vmatmul.f32.gmra.mxu0 %v631
    %v659 = vpop.f32.mrf.mxu0
    %v660 = vadd.f32 0.0, %v659
    %661 = vmatmul.f32.gmra.mxu0 %v634
    %v662 = vpop.f32.mrf.mxu0
    %v663 = vadd.f32 0.0, %v662
    %664 = vmatmul.f32.gmra.mxu0 %v637
    %v665 = vpop.f32.mrf.mxu0
    %v666 = vadd.f32 0.0, %v665
    %667 = vdwg.mxu0
    %vm668 = vcmp.gt.f32.partialorder %v657, 0.0
    %vm669 = vcmp.gt.f32.partialorder %v660, 0.0
    %vm670 = vcmp.gt.f32.partialorder %v663, 0.0
    %vm671 = vcmp.gt.f32.partialorder %v666, 0.0
    %v672 = vmul.f32 %v657, 0.2
    %v673 = vmul.f32 %v660, 0.2
    %v674 = vmul.f32 %v663, 0.2
    %v675 = vmul.f32 %v666, 0.2
    %v676 = vsel %vm668, %v657, %v672
    %v677 = vsel %vm669, %v660, %v673
    %v678 = vsel %vm670, %v663, %v674
    %v679 = vsel %vm671, %v666, %v675
    %680 = vst.msk [vmem:[%s5] sm:$0xff] %vm84, %v676
    %681 = vst.msk [vmem:[%s5 + $0x8] sm:$0xff] %vm84, %v677
    %682 = vst.msk [vmem:[%s5 + $0x10] sm:$0xff] %vm84, %v678
    %683 = vst.msk [vmem:[%s5 + $0x18] sm:$0xff] %vm84, %v679
    %688 = vrot.lane.b32.xlu0 %v676, 120
    %v689 = vpop.permute.xlu0 %688
    %690 = vrot.lane.b32.xlu0 %v677, 120
    %v691 = vpop.permute.xlu0 %690
    %692 = vrot.lane.b32.xlu0 %v678, 120
    %v693 = vpop.permute.xlu0 %692
    %694 = vrot.lane.b32.xlu0 %v679, 120
    %v695 = vpop.permute.xlu0 %694
    %s700 = scalar_lea.vmem %s5, 32
    %701 = vst.msk [vmem:[%s700] sm:$0xff] %vm84, %v689
    %702 = vst.msk [vmem:[%s700 + $0x8] sm:$0xff] %vm84, %v691
    %703 = vst.msk [vmem:[%s700 + $0x10] sm:$0xff] %vm84, %v693
    %704 = vst.msk [vmem:[%s700 + $0x18] sm:$0xff] %vm84, %v695
    // Predicated region
    $region22: #{dgc_forward_pallas.1} parent=1 // pred_check
      _
    $region23: #{dgc_forward_pallas.1} parent=1 // pred_check_branch
      %706 = sbr.rel (0) target = $region25
    $region24: #{dgc_forward_pallas.1} parent=1 // pred_region
      _
    $region25: #{dgc_forward_pallas.1} parent=1 // pred_fallthru
      _
    // Predicated region
    $region26: #{dgc_forward_pallas.1} parent=1 // pred_check
      _
    $region27: #{dgc_forward_pallas.1} parent=1 // pred_check_branch
      %708 = sbr.rel (0) target = $region29
    $region28: #{dgc_forward_pallas.1} parent=1 // pred_region
      %710 = vsyncadd [#allocation3], 0
      %s712 = sshll.u32 [#allocation2], 4
      %s713 = int_to_ptr.vmem [resolvable:$true] %s712
      %s714 = sshll.u32 %s6, 4
      %s715 = int_to_ptr.hbm [resolvable:$true] %s714
      %717 = dma.vmem_to_hbm [thread:$0]  %s713, 16, %s715, [#allocation3]
    $region29: #{dgc_forward_pallas.1} parent=1 // pred_fallthru
      _
    // Predicated region
    $region30: #{dgc_forward_pallas.1} parent=1 // pred_check
      _
    $region31: #{dgc_forward_pallas.1} parent=1 // pred_check_branch
      %719 = sbr.rel (0) target = $region33
    $region32: #{dgc_forward_pallas.1} parent=1 // pred_region
      _
    $region33: #{dgc_forward_pallas.1} parent=1 // pred_fallthru
      _
    // Predicated region
    $region34: #{dgc_forward_pallas.1} parent=1 // pred_check
      _
    $region35: #{dgc_forward_pallas.1} parent=1 // pred_check_branch
      %721 = sbr.rel (0) target = $region37
    $region36: #{dgc_forward_pallas.1} parent=1 // pred_region
      %723 = dma.done [#allocation3], 16
    $region37: #{dgc_forward_pallas.1} parent=1 // pred_fallthru
      _
    %724 = vsyncpa [#allocation3], 1

</llo_original>
